<compile_context>
chip_gen: v5e
topology: v5e:2x2
jax: 0.10.0
libtpu: 0.0.40
codegen_flags: <defaults>
</compile_context>

<pallas_src>
import jax
import jax.numpy as jnp
from jax.experimental import pallas as pl
from jax.experimental.pallas import tpu as pltpu

D_IN = 28 * 28       # 784
D_H1 = 128
D_H2 = 64
D_H2_PAD = 128       # hidden layer padded to full lane width
D_OUT = 10
D_OUT_PAD = 128      # lane-dense padded logits width (multiple of 128)
BM_MAX = 2048        # max batch rows per grid step


def _round_up(x, m):
    return (x + m - 1) // m * m


def mlp_kernel(x_ref, w1_ref, b1_ref, w2_ref, b2_ref, w3_ref, b3_ref, o_ref):
    # x arrives fp32; cast to bf16 in-kernel (single 4B/elem HBM read total).
    x = x_ref[...].astype(jnp.bfloat16)
    # Layer 1: (bm,784)bf16 @ (784,128)bf16 -> f32 acc, +bias, ReLU
    h1 = jnp.dot(x, w1_ref[...], preferred_element_type=jnp.float32)
    h1 = jnp.maximum(h1 + b1_ref[...], 0.0).astype(jnp.bfloat16)
    # Layer 2: (bm,128) @ (128,128) (cols 64..127 of W2/b2 are zero -> pads stay 0)
    h2 = jnp.dot(h1, w2_ref[...], preferred_element_type=jnp.float32)
    h2 = jnp.maximum(h2 + b2_ref[...], 0.0).astype(jnp.bfloat16)
    # Layer 3: (bm,128) @ (128,128) (rows 64..127 and cols 10..127 of W3 are zero)
    out = jnp.dot(h2, w3_ref[...], preferred_element_type=jnp.float32)
    o_ref[...] = (out + b3_ref[...]).astype(o_ref.dtype)


def prepare_params(params):
    """One-time conversion of PyTorch-convention params (w: (out,in), b: (out,))
    into kernel-ready form: transposed to (in,out), cast to bf16, hidden width
    and output width padded to 128 lanes. Biases stay fp32 (added post-acc)."""
    w1, b1, w2, b2, w3, b3 = params
    w1t = w1.T.astype(jnp.bfloat16)                              # (784, 128)
    w2t = jnp.zeros((D_H1, D_H2_PAD), jnp.bfloat16)
    w2t = w2t.at[:, :D_H2].set(w2.T.astype(jnp.bfloat16))        # (128, 128)
    w3t = jnp.zeros((D_H2_PAD, D_OUT_PAD), jnp.bfloat16)
    w3t = w3t.at[:D_H2, :D_OUT].set(w3.T.astype(jnp.bfloat16))   # (128, 128)
    b1r = b1.reshape(1, D_H1).astype(jnp.float32)
    b2r = jnp.zeros((1, D_H2_PAD), jnp.float32)
    b2r = b2r.at[0, :D_H2].set(b2.astype(jnp.float32))
    b3r = jnp.zeros((1, D_OUT_PAD), jnp.float32)
    b3r = b3r.at[0, :D_OUT].set(b3.astype(jnp.float32))
    return (w1t, b1r, w2t, b2r, w3t, b3r)


@jax.jit
def neural_network_forward(x, prepared_params):
    """x: (B, 1, 28, 28) or (B, 28, 28) fp32. Returns logits (B, 10) fp32."""
    w1t, b1r, w2t, b2r, w3t, b3r = prepared_params
    B = x.shape[0]
    x2d = x.reshape(B, -1)                      # nn.Flatten; free for contiguous x

    # Keep the batch sublane-aligned; only pad (by <8 rows) for odd batch sizes.
    if B % 8 == 0:
        Bp = B
        x_in = x2d
    else:
        Bp = _round_up(B, 8)
        x_in = jnp.pad(x2d, ((0, Bp - B), (0, 0)))

    bm = min(BM_MAX, Bp)                        # big tile amortizes step overhead
    grid = (pl.cdiv(Bp, bm),)                   # ragged last block handled by Pallas

    flops = 2 * Bp * (D_IN * D_H1 + D_H1 * D_H2_PAD + D_H2_PAD * D_OUT_PAD)
    bytes_accessed = (x_in.size * 4                                 # fp32 input read
                      + (w1t.size + w2t.size + w3t.size) * 2        # bf16 weights
                      + (b1r.size + b2r.size + b3r.size) * 4        # fp32 biases
                      + Bp * D_OUT_PAD * 2)                         # bf16 output

    out_pad = pl.pallas_call(
        mlp_kernel,
        out_shape=jax.ShapeDtypeStruct((Bp, D_OUT_PAD), jnp.bfloat16),
        grid=grid,
        in_specs=[
            pl.BlockSpec((bm, D_IN), lambda i: (i, 0)),              # x tile (fp32)
            pl.BlockSpec((D_IN, D_H1), lambda i: (0, 0)),            # W1 (resident)
            pl.BlockSpec((1, D_H1), lambda i: (0, 0)),               # b1
            pl.BlockSpec((D_H1, D_H2_PAD), lambda i: (0, 0)),        # W2 (padded)
            pl.BlockSpec((1, D_H2_PAD), lambda i: (0, 0)),           # b2 (padded)
            pl.BlockSpec((D_H2_PAD, D_OUT_PAD), lambda i: (0, 0)),   # W3 (padded)
            pl.BlockSpec((1, D_OUT_PAD), lambda i: (0, 0)),          # b3 (padded)
        ],
        out_specs=pl.BlockSpec((bm, D_OUT_PAD), lambda i: (i, 0)),
        compiler_params=pltpu.CompilerParams(
            dimension_semantics=("parallel",),
            vmem_limit_bytes=32 * 1024 * 1024),
        cost_estimate=pl.CostEstimate(
            flops=flops, transcendentals=0, bytes_accessed=bytes_accessed),
    )(x_in, w1t, b1r, w2t, b2r, w3t, b3r)

    return out_pad[:B, :D_OUT].astype(jnp.float32)


def init_params(key):
    """Deterministic init matching nn.Linear shapes (weight: (out, in))."""
    dims = [(128, 784), (64, 128), (10, 64)]
    params = []
    for (out_d, in_d) in dims:
        key, kw, kb = jax.random.split(key, 3)
        bound = 1.0 / jnp.sqrt(in_d)
        w = jax.random.uniform(kw, (out_d, in_d), jnp.float32, -bound, bound)
        b = jax.random.uniform(kb, (out_d,), jnp.float32, -bound, bound)
        params.extend([w, b])
    return tuple(params)


if __name__ == "__main__":
    key = jax.random.PRNGKey(0)
    k_params, k_x = jax.random.split(key)

    params = init_params(k_params)
    prepared = prepare_params(params)           # one-time transpose/pad/cast
    x = jax.random.normal(k_x, (8, 1, 28, 28), jnp.float32)  # small MNIST-like batch

    logits = neural_network_forward(x, prepared)
    logits = jax.block_until_ready(logits)

    # Sanity check against plain-JAX fp32 reference of the same forward pass.
    # bf16 matmul inputs / bf16 logit store (fp32 accumulation) => loose tolerance.
    w1, b1, w2, b2, w3, b3 = params
    xf = x.reshape(x.shape[0], -1)
    ref = jnp.maximum(xf @ w1.T + b1, 0.0)
    ref = jnp.maximum(ref @ w2.T + b2, 0.0)
    ref = ref @ w3.T + b3

    assert logits.shape == (8, 10)
    assert jnp.allclose(logits, ref, atol=5e-2, rtol=5e-2)

    print("KERNEL_OK")
</pallas_src>

<mosaic_0001>
module attributes {stable_mosaic.version = 11 : i64} {
  func.func @mlp_kernel(%arg0: i32, %arg1: memref<8x784xf32, #tpu.memory_space<vmem>>, %arg2: memref<784x128xbf16, #tpu.memory_space<vmem>>, %arg3: memref<1x128xf32, #tpu.memory_space<vmem>>, %arg4: memref<128x128xbf16, #tpu.memory_space<vmem>>, %arg5: memref<1x128xf32, #tpu.memory_space<vmem>>, %arg6: memref<128x128xbf16, #tpu.memory_space<vmem>>, %arg7: memref<1x128xf32, #tpu.memory_space<vmem>>, %arg8: memref<8x128xbf16, #tpu.memory_space<vmem>>) attributes {dimension_semantics = [#tpu.dimension_semantics<parallel>], iteration_bounds = array<i64: 1>, scalar_prefetch = 0 : i64, scratch_operands = 0 : i64, tpu.core_type = #tpu.core_type<tc>, window_params = [{transform_indices = @transform_0, window_bounds = array<i64: 8, 784>}, {pipeline_mode = #tpu.pipeline_mode<synchronous>, transform_indices = @transform_1, window_bounds = array<i64: 784, 128>}, {pipeline_mode = #tpu.pipeline_mode<synchronous>, transform_indices = @transform_2, window_bounds = array<i64: 1, 128>}, {pipeline_mode = #tpu.pipeline_mode<synchronous>, transform_indices = @transform_3, window_bounds = array<i64: 128, 128>}, {pipeline_mode = #tpu.pipeline_mode<synchronous>, transform_indices = @transform_4, window_bounds = array<i64: 1, 128>}, {pipeline_mode = #tpu.pipeline_mode<synchronous>, transform_indices = @transform_5, window_bounds = array<i64: 128, 128>}, {pipeline_mode = #tpu.pipeline_mode<synchronous>, transform_indices = @transform_6, window_bounds = array<i64: 1, 128>}, {transform_indices = @transform_7, window_bounds = array<i64: 8, 128>}]} {
    %c0 = arith.constant 0 : index
    %c0_0 = arith.constant 0 : index
    %0 = vector.load %arg1[%c0, %c0_0] : memref<8x784xf32, #tpu.memory_space<vmem>>, vector<8x784xf32>
    %1 = arith.truncf %0 : vector<8x784xf32> to vector<8x784xbf16>
    %c0_1 = arith.constant 0 : index
    %c0_2 = arith.constant 0 : index
    %2 = vector.load %arg2[%c0_1, %c0_2] : memref<784x128xbf16, #tpu.memory_space<vmem>>, vector<784x128xbf16>
    %cst = arith.constant dense<0.000000e+00> : vector<8x128xf32>
    %3 = tpu.matmul %1, %2, %cst {dimension_numbers = #tpu.dot_dimension_numbers<[1], [0], [0], [1], [0, 0, 1, 1], [], []>} : vector<8x784xbf16>, vector<784x128xbf16>, vector<8x128xf32> -> vector<8x128xf32>
    %c0_3 = arith.constant 0 : index
    %c0_4 = arith.constant 0 : index
    %4 = vector.load %arg3[%c0_3, %c0_4] : memref<1x128xf32, #tpu.memory_space<vmem>>, vector<1x128xf32>
    %5 = vector.broadcast %4 : vector<1x128xf32> to vector<8x128xf32>
    %6 = arith.addf %3, %5 : vector<8x128xf32>
    %cst_5 = arith.constant 0.000000e+00 : f32
    %7 = vector.broadcast %cst_5 : f32 to vector<8x128xf32>
    %8 = arith.maximumf %6, %7 : vector<8x128xf32>
    %9 = arith.truncf %8 : vector<8x128xf32> to vector<8x128xbf16>
    %c0_6 = arith.constant 0 : index
    %c0_7 = arith.constant 0 : index
    %10 = vector.load %arg4[%c0_6, %c0_7] : memref<128x128xbf16, #tpu.memory_space<vmem>>, vector<128x128xbf16>
    %cst_8 = arith.constant dense<0.000000e+00> : vector<8x128xf32>
    %11 = tpu.matmul %9, %10, %cst_8 {dimension_numbers = #tpu.dot_dimension_numbers<[1], [0], [0], [1], [0, 0, 1, 1], [], []>} : vector<8x128xbf16>, vector<128x128xbf16>, vector<8x128xf32> -> vector<8x128xf32>
    %c0_9 = arith.constant 0 : index
    %c0_10 = arith.constant 0 : index
    %12 = vector.load %arg5[%c0_9, %c0_10] : memref<1x128xf32, #tpu.memory_space<vmem>>, vector<1x128xf32>
    %13 = vector.broadcast %12 : vector<1x128xf32> to vector<8x128xf32>
    %14 = arith.addf %11, %13 : vector<8x128xf32>
    %cst_11 = arith.constant 0.000000e+00 : f32
    %15 = vector.broadcast %cst_11 : f32 to vector<8x128xf32>
    %16 = arith.maximumf %14, %15 : vector<8x128xf32>
    %17 = arith.truncf %16 : vector<8x128xf32> to vector<8x128xbf16>
    %c0_12 = arith.constant 0 : index
    %c0_13 = arith.constant 0 : index
    %18 = vector.load %arg6[%c0_12, %c0_13] : memref<128x128xbf16, #tpu.memory_space<vmem>>, vector<128x128xbf16>
    %cst_14 = arith.constant dense<0.000000e+00> : vector<8x128xf32>
    %19 = tpu.matmul %17, %18, %cst_14 {dimension_numbers = #tpu.dot_dimension_numbers<[1], [0], [0], [1], [0, 0, 1, 1], [], []>} : vector<8x128xbf16>, vector<128x128xbf16>, vector<8x128xf32> -> vector<8x128xf32>
    %c0_15 = arith.constant 0 : index
    %c0_16 = arith.constant 0 : index
    %20 = vector.load %arg7[%c0_15, %c0_16] : memref<1x128xf32, #tpu.memory_space<vmem>>, vector<1x128xf32>
    %21 = vector.broadcast %20 : vector<1x128xf32> to vector<8x128xf32>
    %22 = arith.addf %19, %21 : vector<8x128xf32>
    %23 = arith.truncf %22 : vector<8x128xf32> to vector<8x128xbf16>
    %c0_17 = arith.constant 0 : index
    %c0_18 = arith.constant 0 : index
    %24 = vector.load %arg8[%c0_17, %c0_18] : memref<8x128xbf16, #tpu.memory_space<vmem>>, vector<8x128xbf16>
    tpu.vector_store %arg8[%c0_17, %c0_18], %23 {strides = array<i32>} : memref<8x128xbf16, #tpu.memory_space<vmem>>, vector<8x128xbf16>,
    return
  }
  func.func @transform_0(%arg0: i32) -> (i32, i32) {
    %c0_i32 = arith.constant 0 : i32
    %c0_i32_0 = arith.constant 0 : i32
    return %arg0, %c0_i32 : i32, i32
  }
  func.func @transform_1(%arg0: i32) -> (i32, i32) {
    %c0_i32 = arith.constant 0 : i32
    %c0_i32_0 = arith.constant 0 : i32
    %c0_i32_1 = arith.constant 0 : i32
    return %c0_i32, %c0_i32_0 : i32, i32
  }
  func.func @transform_2(%arg0: i32) -> (i32, i32) {
    %c0_i32 = arith.constant 0 : i32
    %c0_i32_0 = arith.constant 0 : i32
    %c0_i32_1 = arith.constant 0 : i32
    return %c0_i32, %c0_i32_0 : i32, i32
  }
  func.func @transform_3(%arg0: i32) -> (i32, i32) {
    %c0_i32 = arith.constant 0 : i32
    %c0_i32_0 = arith.constant 0 : i32
    %c0_i32_1 = arith.constant 0 : i32
    return %c0_i32, %c0_i32_0 : i32, i32
  }
  func.func @transform_4(%arg0: i32) -> (i32, i32) {
    %c0_i32 = arith.constant 0 : i32
    %c0_i32_0 = arith.constant 0 : i32
    %c0_i32_1 = arith.constant 0 : i32
    return %c0_i32, %c0_i32_0 : i32, i32
  }
  func.func @transform_5(%arg0: i32) -> (i32, i32) {
    %c0_i32 = arith.constant 0 : i32
    %c0_i32_0 = arith.constant 0 : i32
    %c0_i32_1 = arith.constant 0 : i32
    return %c0_i32, %c0_i32_0 : i32, i32
  }
  func.func @transform_6(%arg0: i32) -> (i32, i32) {
    %c0_i32 = arith.constant 0 : i32
    %c0_i32_0 = arith.constant 0 : i32
    %c0_i32_1 = arith.constant 0 : i32
    return %c0_i32, %c0_i32_0 : i32, i32
  }
  func.func @transform_7(%arg0: i32) -> (i32, i32) {
    %c0_i32 = arith.constant 0 : i32
    %c0_i32_0 = arith.constant 0 : i32
    return %arg0, %c0_i32 : i32, i32
  }
}

</mosaic_0001>

<llo_original>
// kernel: neural_network_forward.1
$region0: #{neural_network_forward.1}
  #allocation0 [shape = 'u32[]', space=smem, size = 0x4, offset = 0x4, fixed_abs, tag = 'smem constant byte address 0x4 - core index']
  #allocation1 [shape = 'u32[72,128]{1,0:T(1,128)}', space=vmem, size = 0x9000, scoped, tag = 'internal scratch']
  %s0 = inlined_call_operand.vmem [shape: f32[8,784], index: 0, kind: input, shape index: {}]
  %s1 = inlined_call_operand.vmem [shape: bf16[784,128], index: 1, kind: input, shape index: {}]
  %s2 = inlined_call_operand.vmem [shape: f32[1,128], index: 2, kind: input, shape index: {}]
  %s3 = inlined_call_operand.vmem [shape: bf16[128,128], index: 3, kind: input, shape index: {}]
  %s4 = inlined_call_operand.vmem [shape: f32[1,128], index: 4, kind: input, shape index: {}]
  %s5 = inlined_call_operand.vmem [shape: bf16[128,128], index: 5, kind: input, shape index: {}]
  %s6 = inlined_call_operand.vmem [shape: f32[1,128], index: 6, kind: input, shape index: {}]
  %s7 = inlined_call_operand.vmem [shape: bf16[8,128], index: 7, kind: output, shape index: {}]
  %s8 = sld [smem:[#allocation0]]
  $region38: #{neural_network_forward.1} parent=0
    _
  %s10 = ssub.s32 1, %s8
  %s11 = scalar_select 0, %s10, %s8
  // Predicated region
  $region2: #{neural_network_forward.1} parent=0 // pred_check
    _
  $region3: #{neural_network_forward.1} parent=0 // pred_check_branch
    %13 = sbr.rel (0) target = $region5
  $region4: #{neural_network_forward.1} parent=0 // pred_region
    _
  $region5: #{neural_network_forward.1} parent=0 // pred_fallthru
    _
  // Predicated region
  $region6: #{neural_network_forward.1} parent=0 // pred_check
    _
  $region7: #{neural_network_forward.1} parent=0 // pred_check_branch
    %15 = sbr.rel (0) target = $region9
  $region8: #{neural_network_forward.1} parent=0 // pred_region
    _
  $region9: #{neural_network_forward.1} parent=0 // pred_fallthru
    _
  // Predicated region
  $region10: #{neural_network_forward.1} parent=0 // pred_check
    _
  $region11: #{neural_network_forward.1} parent=0 // pred_check_branch
    %17 = sbr.rel (0) target = $region13
  $region12: #{neural_network_forward.1} parent=0 // pred_region
    _
  $region13: #{neural_network_forward.1} parent=0 // pred_fallthru
    _
  // Predicated region
  $region14: #{neural_network_forward.1} parent=0 // pred_check
    _
  $region15: #{neural_network_forward.1} parent=0 // pred_check_branch
    %19 = sbr.rel (0) target = $region17
  $region16: #{neural_network_forward.1} parent=0 // pred_region
    _
  $region17: #{neural_network_forward.1} parent=0 // pred_fallthru
    _
  // Predicated region
  $region18: #{neural_network_forward.1} parent=0 // pred_check
    _
  $region19: #{neural_network_forward.1} parent=0 // pred_check_branch
    %21 = sbr.rel (0) target = $region21
  $region20: #{neural_network_forward.1} parent=0 // pred_region
    _
  $region21: #{neural_network_forward.1} parent=0 // pred_fallthru
    _
  // Predicated region
  $region22: #{neural_network_forward.1} parent=0 // pred_check
    _
  $region23: #{neural_network_forward.1} parent=0 // pred_check_branch
    %23 = sbr.rel (0) target = $region25
  $region24: #{neural_network_forward.1} parent=0 // pred_region
    _
  $region25: #{neural_network_forward.1} parent=0 // pred_fallthru
    _
  // Predicated region
  $region26: #{neural_network_forward.1} parent=0 // pred_check
    _
  $region27: #{neural_network_forward.1} parent=0 // pred_check_branch
    %25 = sbr.rel (0) target = $region29
  $region28: #{neural_network_forward.1} parent=0 // pred_region
    _
  $region29: #{neural_network_forward.1} parent=0 // pred_fallthru
    _
  %v27 = vld [vmem:[%s0] sm:$0xff]
  %v28 = vld [vmem:[%s0 + $0x8] sm:$0xff]
  %v29 = vld [vmem:[%s0 + $0x10] sm:$0xff]
  %v30 = vld [vmem:[%s0 + $0x18] sm:$0xff]
  %v31 = vld [vmem:[%s0 + $0x20] sm:$0xff]
  %v32 = vld [vmem:[%s0 + $0x28] sm:$0xff]
  %v33 = vld [vmem:[%s0 + $0x30] sm:$0xff]
  %v34 = vpack.c.bf16 %v27, %v27
  %v35 = vpack.c.bf16 %v28, %v28
  %v36 = vpack.c.bf16 %v29, %v29
  %v37 = vpack.c.bf16 %v30, %v30
  %v38 = vpack.c.bf16 %v31, %v31
  %v39 = vpack.c.bf16 %v32, %v32
  %v40 = vpack.c.bf16 %v33, %v33
  %v41 = vld [vmem:[%s1] sm:$0xf]
  %v42 = vld [vmem:[%s1 + $0x4] sm:$0xf]
  %v43 = vld [vmem:[%s1 + $0x8] sm:$0xf]
  %v44 = vld [vmem:[%s1 + $0xc] sm:$0xf]
  %v45 = vld [vmem:[%s1 + $0x10] sm:$0xf]
  %v46 = vld [vmem:[%s1 + $0x14] sm:$0xf]
  %v47 = vld [vmem:[%s1 + $0x18] sm:$0xf]
  %v48 = vld [vmem:[%s1 + $0x1c] sm:$0xf]
  %v49 = vld [vmem:[%s1 + $0x20] sm:$0xf]
  %v50 = vld [vmem:[%s1 + $0x24] sm:$0xf]
  %v51 = vld [vmem:[%s1 + $0x28] sm:$0xf]
  %v52 = vld [vmem:[%s1 + $0x2c] sm:$0xf]
  %v53 = vld [vmem:[%s1 + $0x30] sm:$0xf]
  %v54 = vld [vmem:[%s1 + $0x34] sm:$0xf]
  %v55 = vld [vmem:[%s1 + $0x38] sm:$0xf]
  %v56 = vld [vmem:[%s1 + $0x3c] sm:$0xf]
  %v57 = vld [vmem:[%s1 + $0x40] sm:$0xf]
  %v58 = vld [vmem:[%s1 + $0x44] sm:$0xf]
  %v59 = vld [vmem:[%s1 + $0x48] sm:$0xf]
  %v60 = vld [vmem:[%s1 + $0x4c] sm:$0xf]
  %v61 = vld [vmem:[%s1 + $0x50] sm:$0xf]
  %v62 = vld [vmem:[%s1 + $0x54] sm:$0xf]
  %v63 = vld [vmem:[%s1 + $0x58] sm:$0xf]
  %v64 = vld [vmem:[%s1 + $0x5c] sm:$0xf]
  %v65 = vld [vmem:[%s1 + $0x60] sm:$0xf]
  %v66 = vld [vmem:[%s1 + $0x64] sm:$0xf]
  %v67 = vld [vmem:[%s1 + $0x68] sm:$0xf]
  %v68 = vld [vmem:[%s1 + $0x6c] sm:$0xf]
  %v69 = vld [vmem:[%s1 + $0x70] sm:$0xf]
  %v70 = vld [vmem:[%s1 + $0x74] sm:$0xf]
  %v71 = vld [vmem:[%s1 + $0x78] sm:$0xf]
  %v72 = vld [vmem:[%s1 + $0x7c] sm:$0xf]
  %v73 = vld [vmem:[%s1 + $0x80] sm:$0xf]
  %v74 = vld [vmem:[%s1 + $0x84] sm:$0xf]
  %v75 = vld [vmem:[%s1 + $0x88] sm:$0xf]
  %v76 = vld [vmem:[%s1 + $0x8c] sm:$0xf]
  %v77 = vld [vmem:[%s1 + $0x90] sm:$0xf]
  %v78 = vld [vmem:[%s1 + $0x94] sm:$0xf]
  %v79 = vld [vmem:[%s1 + $0x98] sm:$0xf]
  %v80 = vld [vmem:[%s1 + $0x9c] sm:$0xf]
  %v81 = vld [vmem:[%s1 + $0xa0] sm:$0xf]
  %v82 = vld [vmem:[%s1 + $0xa4] sm:$0xf]
  %v83 = vld [vmem:[%s1 + $0xa8] sm:$0xf]
  %v84 = vld [vmem:[%s1 + $0xac] sm:$0xf]
  %v85 = vld [vmem:[%s1 + $0xb0] sm:$0xf]
  %v86 = vld [vmem:[%s1 + $0xb4] sm:$0xf]
  %v87 = vld [vmem:[%s1 + $0xb8] sm:$0xf]
  %v88 = vld [vmem:[%s1 + $0xbc] sm:$0xf]
  %v89 = vld [vmem:[%s1 + $0xc0] sm:$0xf]
  %v90 = vld [vmem:[%s1 + $0xc4] sm:$0xf]
  %v91 = vld [vmem:[%s1 + $0xc8] sm:$0xf]
  %v92 = vld [vmem:[%s1 + $0xcc] sm:$0xf]
  %v93 = vld [vmem:[%s1 + $0xd0] sm:$0xf]
  %v94 = vld [vmem:[%s1 + $0xd4] sm:$0xf]
  %v95 = vld [vmem:[%s1 + $0xd8] sm:$0xf]
  %v96 = vld [vmem:[%s1 + $0xdc] sm:$0xf]
  %v97 = vld [vmem:[%s1 + $0xe0] sm:$0xf]
  %v98 = vld [vmem:[%s1 + $0xe4] sm:$0xf]
  %v99 = vld [vmem:[%s1 + $0xe8] sm:$0xf]
  %v100 = vld [vmem:[%s1 + $0xec] sm:$0xf]
  %v101 = vld [vmem:[%s1 + $0xf0] sm:$0xf]
  %v102 = vld [vmem:[%s1 + $0xf4] sm:$0xf]
  %v103 = vld [vmem:[%s1 + $0xf8] sm:$0xf]
  %v104 = vld [vmem:[%s1 + $0xfc] sm:$0xf]
  %v105 = vld [vmem:[%s1 + $0x100] sm:$0xf]
  %v106 = vld [vmem:[%s1 + $0x104] sm:$0xf]
  %v107 = vld [vmem:[%s1 + $0x108] sm:$0xf]
  %v108 = vld [vmem:[%s1 + $0x10c] sm:$0xf]
  %v109 = vld [vmem:[%s1 + $0x110] sm:$0xf]
  %v110 = vld [vmem:[%s1 + $0x114] sm:$0xf]
  %v111 = vld [vmem:[%s1 + $0x118] sm:$0xf]
  %v112 = vld [vmem:[%s1 + $0x11c] sm:$0xf]
  %v113 = vld [vmem:[%s1 + $0x120] sm:$0xf]
  %v114 = vld [vmem:[%s1 + $0x124] sm:$0xf]
  %v115 = vld [vmem:[%s1 + $0x128] sm:$0xf]
  %v116 = vld [vmem:[%s1 + $0x12c] sm:$0xf]
  %v117 = vld [vmem:[%s1 + $0x130] sm:$0xf]
  %v118 = vld [vmem:[%s1 + $0x134] sm:$0xf]
  %v119 = vld [vmem:[%s1 + $0x138] sm:$0xf]
  %v120 = vld [vmem:[%s1 + $0x13c] sm:$0xf]
  %v121 = vld [vmem:[%s1 + $0x140] sm:$0xf]
  %v122 = vld [vmem:[%s1 + $0x144] sm:$0xf]
  %v123 = vld [vmem:[%s1 + $0x148] sm:$0xf]
  %v124 = vld [vmem:[%s1 + $0x14c] sm:$0xf]
  %v125 = vld [vmem:[%s1 + $0x150] sm:$0xf]
  %v126 = vld [vmem:[%s1 + $0x154] sm:$0xf]
  %v127 = vld [vmem:[%s1 + $0x158] sm:$0xf]
  %v128 = vld [vmem:[%s1 + $0x15c] sm:$0xf]
  %v129 = vld [vmem:[%s1 + $0x160] sm:$0xf]
  %v130 = vld [vmem:[%s1 + $0x164] sm:$0xf]
  %v131 = vld [vmem:[%s1 + $0x168] sm:$0xf]
  %v132 = vld [vmem:[%s1 + $0x16c] sm:$0xf]
  %v133 = vld [vmem:[%s1 + $0x170] sm:$0xf]
  %v134 = vld [vmem:[%s1 + $0x174] sm:$0xf]
  %v135 = vld [vmem:[%s1 + $0x178] sm:$0xf]
  %v136 = vld [vmem:[%s1 + $0x17c] sm:$0xf]
  %v137 = vld [vmem:[%s1 + $0x180] sm:$0xf]
  %v138 = vld [vmem:[%s1 + $0x184] sm:$0xf]
  %v139 = vld [vmem:[%s2] sm:$0x1]
  %v141 = vperm.slane %v139, 0
  %v241 = vunpack.c.l.b16 %v41
  %v242 = vunpack.c.l.b16 %v42
  %v243 = vunpack.c.l.b16 %v43
  %v244 = vunpack.c.l.b16 %v44
  %v245 = vunpack.c.l.b16 %v45
  %v246 = vunpack.c.l.b16 %v46
  %v247 = vunpack.c.l.b16 %v47
  %v248 = vunpack.c.l.b16 %v48
  %v249 = vunpack.c.l.b16 %v49
  %v250 = vunpack.c.l.b16 %v50
  %v251 = vunpack.c.l.b16 %v51
  %v252 = vunpack.c.l.b16 %v52
  %v253 = vunpack.c.l.b16 %v53
  %v254 = vunpack.c.l.b16 %v54
  %v255 = vunpack.c.l.b16 %v55
  %v256 = vunpack.c.l.b16 %v56
  %v257 = vunpack.c.l.b16 %v57
  %v258 = vunpack.c.l.b16 %v58
  %v259 = vunpack.c.l.b16 %v59
  %v260 = vunpack.c.l.b16 %v60
  %v261 = vunpack.c.l.b16 %v61
  %v262 = vunpack.c.l.b16 %v62
  %v263 = vunpack.c.l.b16 %v63
  %v264 = vunpack.c.l.b16 %v64
  %v265 = vunpack.c.l.b16 %v65
  %v266 = vunpack.c.l.b16 %v66
  %v267 = vunpack.c.l.b16 %v67
  %v268 = vunpack.c.l.b16 %v68
  %v269 = vunpack.c.l.b16 %v69
  %v270 = vunpack.c.l.b16 %v70
  %v271 = vunpack.c.l.b16 %v71
  %v272 = vunpack.c.l.b16 %v72
  %v273 = vunpack.c.l.b16 %v73
  %v274 = vunpack.c.l.b16 %v74
  %v275 = vunpack.c.l.b16 %v75
  %v276 = vunpack.c.l.b16 %v76
  %v277 = vunpack.c.l.b16 %v77
  %v278 = vunpack.c.l.b16 %v78
  %v279 = vunpack.c.l.b16 %v79
  %v280 = vunpack.c.l.b16 %v80
  %v281 = vunpack.c.l.b16 %v81
  %v282 = vunpack.c.l.b16 %v82
  %v283 = vunpack.c.l.b16 %v83
  %v284 = vunpack.c.l.b16 %v84
  %v285 = vunpack.c.l.b16 %v85
  %v286 = vunpack.c.l.b16 %v86
  %v287 = vunpack.c.l.b16 %v87
  %v288 = vunpack.c.l.b16 %v88
  %v289 = vunpack.c.l.b16 %v89
  %v290 = vunpack.c.l.b16 %v90
  %v291 = vunpack.c.l.b16 %v91
  %v292 = vunpack.c.l.b16 %v92
  %v293 = vunpack.c.l.b16 %v93
  %v294 = vunpack.c.l.b16 %v94
  %v295 = vunpack.c.l.b16 %v95
  %v296 = vunpack.c.l.b16 %v96
  %v297 = vunpack.c.l.b16 %v97
  %v298 = vunpack.c.l.b16 %v98
  %v299 = vunpack.c.l.b16 %v99
  %v300 = vunpack.c.l.b16 %v100
  %v301 = vunpack.c.l.b16 %v101
  %v302 = vunpack.c.l.b16 %v102
  %v303 = vunpack.c.l.b16 %v103
  %v304 = vunpack.c.l.b16 %v104
  %v305 = vunpack.c.l.b16 %v105
  %v306 = vunpack.c.l.b16 %v106
  %v307 = vunpack.c.l.b16 %v107
  %v308 = vunpack.c.l.b16 %v108
  %v309 = vunpack.c.l.b16 %v109
  %v310 = vunpack.c.l.b16 %v110
  %v311 = vunpack.c.l.b16 %v111
  %v312 = vunpack.c.l.b16 %v112
  %v313 = vunpack.c.l.b16 %v113
  %v314 = vunpack.c.l.b16 %v114
  %v315 = vunpack.c.l.b16 %v115
  %v316 = vunpack.c.l.b16 %v116
  %v317 = vunpack.c.l.b16 %v117
  %v318 = vunpack.c.l.b16 %v118
  %v319 = vunpack.c.l.b16 %v119
  %v320 = vunpack.c.l.b16 %v120
  %v321 = vunpack.c.l.b16 %v121
  %v322 = vunpack.c.l.b16 %v122
  %v323 = vunpack.c.l.b16 %v123
  %v324 = vunpack.c.l.b16 %v124
  %v325 = vunpack.c.l.b16 %v125
  %v326 = vunpack.c.l.b16 %v126
  %v327 = vunpack.c.l.b16 %v127
  %v328 = vunpack.c.l.b16 %v128
  %v329 = vunpack.c.l.b16 %v129
  %v330 = vunpack.c.l.b16 %v130
  %v331 = vunpack.c.l.b16 %v131
  %v332 = vunpack.c.l.b16 %v132
  %v333 = vunpack.c.l.b16 %v133
  %v334 = vunpack.c.l.b16 %v134
  %v335 = vunpack.c.l.b16 %v135
  %v336 = vunpack.c.l.b16 %v136
  %v337 = vunpack.c.l.b16 %v137
  %v338 = vunpack.c.l.b16 %v138
  %v339 = vpack.c.b16 %v242, %v241
  %v340 = vpack.c.b16 %v244, %v243
  %v341 = vpack.c.b16 %v246, %v245
  %v342 = vpack.c.b16 %v248, %v247
  %v343 = vpack.c.b16 %v250, %v249
  %v344 = vpack.c.b16 %v252, %v251
  %v345 = vpack.c.b16 %v254, %v253
  %v346 = vpack.c.b16 %v256, %v255
  %v347 = vpack.c.b16 %v258, %v257
  %v348 = vpack.c.b16 %v260, %v259
  %v349 = vpack.c.b16 %v262, %v261
  %v350 = vpack.c.b16 %v264, %v263
  %v351 = vpack.c.b16 %v266, %v265
  %v352 = vpack.c.b16 %v268, %v267
  %v353 = vpack.c.b16 %v270, %v269
  %v354 = vpack.c.b16 %v272, %v271
  %v355 = vpack.c.b16 %v274, %v273
  %v356 = vpack.c.b16 %v276, %v275
  %v357 = vpack.c.b16 %v278, %v277
  %v358 = vpack.c.b16 %v280, %v279
  %v359 = vpack.c.b16 %v282, %v281
  %v360 = vpack.c.b16 %v284, %v283
  %v361 = vpack.c.b16 %v286, %v285
  %v362 = vpack.c.b16 %v288, %v287
  %v363 = vpack.c.b16 %v290, %v289
  %v364 = vpack.c.b16 %v292, %v291
  %v365 = vpack.c.b16 %v294, %v293
  %v366 = vpack.c.b16 %v296, %v295
  %v367 = vpack.c.b16 %v298, %v297
  %v368 = vpack.c.b16 %v300, %v299
  %v369 = vpack.c.b16 %v302, %v301
  %v370 = vpack.c.b16 %v304, %v303
  %v371 = vpack.c.b16 %v306, %v305
  %v372 = vpack.c.b16 %v308, %v307
  %v373 = vpack.c.b16 %v310, %v309
  %v374 = vpack.c.b16 %v312, %v311
  %v375 = vpack.c.b16 %v314, %v313
  %v376 = vpack.c.b16 %v316, %v315
  %v377 = vpack.c.b16 %v318, %v317
  %v378 = vpack.c.b16 %v320, %v319
  %v379 = vpack.c.b16 %v322, %v321
  %v380 = vpack.c.b16 %v324, %v323
  %v381 = vpack.c.b16 %v326, %v325
  %v382 = vpack.c.b16 %v328, %v327
  %v383 = vpack.c.b16 %v330, %v329
  %v384 = vpack.c.b16 %v332, %v331
  %v385 = vpack.c.b16 %v334, %v333
  %v386 = vpack.c.b16 %v336, %v335
  %v387 = vpack.c.b16 %v338, %v337
  %vm437 = vcmask 130048
  %v439 = vsel %vm437, %v40, 0
  %441 = vmatpush.bf16.msra.mxu0 %v346
  %442 = vmatpush.bf16.msra.mxu0 %v345
  %443 = vmatpush.bf16.msra.mxu0 %v344
  %444 = vmatpush.bf16.msra.mxu0 %v343
  %445 = vmatpush.bf16.msra.mxu0 %v342
  %446 = vmatpush.bf16.msra.mxu0 %v341
  %447 = vmatpush.bf16.msra.mxu0 %v340
  %448 = vmatpush.bf16.msra.mxu0 %v339
  %449 = vmatmul.bf16.gmra.mxu0 %v34
  %v450 = vpop.f32.mrf.mxu0
  %v451 = vadd.f32 %v141, %v450
  %v452 = vpop.f32.mrf.mxu0
  %453 = vdwg.mxu0
  %454 = vmatpush.bf16.msra.mxu0 %v354
  %455 = vmatpush.bf16.msra.mxu0 %v353
  %456 = vmatpush.bf16.msra.mxu0 %v352
  %457 = vmatpush.bf16.msra.mxu0 %v351
  %458 = vmatpush.bf16.msra.mxu0 %v350
  %459 = vmatpush.bf16.msra.mxu0 %v349
  %460 = vmatpush.bf16.msra.mxu0 %v348
  %461 = vmatpush.bf16.msra.mxu0 %v347
  %462 = vmatmul.bf16.gmra.mxu0 %v35
  %v463 = vpop.f32.mrf.mxu0
  %v464 = vadd.f32 %v451, %v463
  %v465 = vpop.f32.mrf.mxu0
  %466 = vdwg.mxu0
  %467 = vmatpush.bf16.msra.mxu0 %v362
  %468 = vmatpush.bf16.msra.mxu0 %v361
  %469 = vmatpush.bf16.msra.mxu0 %v360
  %470 = vmatpush.bf16.msra.mxu0 %v359
  %471 = vmatpush.bf16.msra.mxu0 %v358
  %472 = vmatpush.bf16.msra.mxu0 %v357
  %473 = vmatpush.bf16.msra.mxu0 %v356
  %474 = vmatpush.bf16.msra.mxu0 %v355
  %475 = vmatmul.bf16.gmra.mxu0 %v36
  %v476 = vpop.f32.mrf.mxu0
  %v477 = vadd.f32 %v464, %v476
  %v478 = vpop.f32.mrf.mxu0
  %479 = vdwg.mxu0
  %480 = vmatpush.bf16.msra.mxu0 %v370
  %481 = vmatpush.bf16.msra.mxu0 %v369
  %482 = vmatpush.bf16.msra.mxu0 %v368
  %483 = vmatpush.bf16.msra.mxu0 %v367
  %484 = vmatpush.bf16.msra.mxu0 %v366
  %485 = vmatpush.bf16.msra.mxu0 %v365
  %486 = vmatpush.bf16.msra.mxu0 %v364
  %487 = vmatpush.bf16.msra.mxu0 %v363
  %488 = vmatmul.bf16.gmra.mxu0 %v37
  %v489 = vpop.f32.mrf.mxu0
  %v490 = vadd.f32 %v477, %v489
  %v491 = vpop.f32.mrf.mxu0
  %492 = vdwg.mxu0
  %493 = vmatpush.bf16.msra.mxu0 %v378
  %494 = vmatpush.bf16.msra.mxu0 %v377
  %495 = vmatpush.bf16.msra.mxu0 %v376
  %496 = vmatpush.bf16.msra.mxu0 %v375
  %497 = vmatpush.bf16.msra.mxu0 %v374
  %498 = vmatpush.bf16.msra.mxu0 %v373
  %499 = vmatpush.bf16.msra.mxu0 %v372
  %500 = vmatpush.bf16.msra.mxu0 %v371
  %501 = vmatmul.bf16.gmra.mxu0 %v38
  %v502 = vpop.f32.mrf.mxu0
  %v503 = vadd.f32 %v490, %v502
  %v504 = vpop.f32.mrf.mxu0
  %505 = vdwg.mxu0
  %506 = vmatpush.bf16.msra.mxu0 %v386
  %507 = vmatpush.bf16.msra.mxu0 %v385
  %508 = vmatpush.bf16.msra.mxu0 %v384
  %509 = vmatpush.bf16.msra.mxu0 %v383
  %510 = vmatpush.bf16.msra.mxu0 %v382
  %511 = vmatpush.bf16.msra.mxu0 %v381
  %512 = vmatpush.bf16.msra.mxu0 %v380
  %513 = vmatpush.bf16.msra.mxu0 %v379
  %514 = vmatmul.bf16.gmra.mxu0 %v39
  %v515 = vpop.f32.mrf.mxu0
  %v516 = vadd.f32 %v503, %v515
  %v517 = vpop.f32.mrf.mxu0
  %518 = vdwg.mxu0
  %519 = vmatpush.bf16.msra.mxu0 0
  %520 = vmatpush.bf16.msra.mxu0 0
  %521 = vmatpush.bf16.msra.mxu0 0
  %522 = vmatpush.bf16.msra.mxu0 0
  %523 = vmatpush.bf16.msra.mxu0 0
  %524 = vmatpush.bf16.msra.mxu0 0
  %525 = vmatpush.bf16.msra.mxu0 0
  %526 = vmatpush.bf16.msra.mxu0 %v387
  %527 = vmatmul.bf16.gmra.mxu0 %v439
  %v528 = vpop.f32.mrf.mxu0
  %v529 = vadd.f32 %v516, %v528
  %v530 = vpop.f32.mrf.mxu0
  %531 = vdwg.mxu0
  %v532 = vmax.f32 %v529, 0.0
  %v533 = vpack.c.bf16 %v532, %v532
  %v534 = vld [vmem:[%s3] sm:$0xf]
  %v535 = vld [vmem:[%s3 + $0x4] sm:$0xf]
  %v536 = vld [vmem:[%s3 + $0x8] sm:$0xf]
  %v537 = vld [vmem:[%s3 + $0xc] sm:$0xf]
  %v538 = vld [vmem:[%s3 + $0x10] sm:$0xf]
  %v539 = vld [vmem:[%s3 + $0x14] sm:$0xf]
  %v540 = vld [vmem:[%s3 + $0x18] sm:$0xf]
  %v541 = vld [vmem:[%s3 + $0x1c] sm:$0xf]
  %v542 = vld [vmem:[%s3 + $0x20] sm:$0xf]
  %v543 = vld [vmem:[%s3 + $0x24] sm:$0xf]
  %v544 = vld [vmem:[%s3 + $0x28] sm:$0xf]
  %v545 = vld [vmem:[%s3 + $0x2c] sm:$0xf]
  %v546 = vld [vmem:[%s3 + $0x30] sm:$0xf]
  %v547 = vld [vmem:[%s3 + $0x34] sm:$0xf]
  %v548 = vld [vmem:[%s3 + $0x38] sm:$0xf]
  %v549 = vld [vmem:[%s3 + $0x3c] sm:$0xf]
  %v550 = vld [vmem:[%s4] sm:$0x1]
  %v552 = vperm.slane %v550, 0
  %v570 = vunpack.c.l.b16 %v534
  %v571 = vunpack.c.l.b16 %v535
  %v572 = vunpack.c.l.b16 %v536
  %v573 = vunpack.c.l.b16 %v537
  %v574 = vunpack.c.l.b16 %v538
  %v575 = vunpack.c.l.b16 %v539
  %v576 = vunpack.c.l.b16 %v540
  %v577 = vunpack.c.l.b16 %v541
  %v578 = vunpack.c.l.b16 %v542
  %v579 = vunpack.c.l.b16 %v543
  %v580 = vunpack.c.l.b16 %v544
  %v581 = vunpack.c.l.b16 %v545
  %v582 = vunpack.c.l.b16 %v546
  %v583 = vunpack.c.l.b16 %v547
  %v584 = vunpack.c.l.b16 %v548
  %v585 = vunpack.c.l.b16 %v549
  %v586 = vpack.c.b16 %v571, %v570
  %v587 = vpack.c.b16 %v573, %v572
  %v588 = vpack.c.b16 %v575, %v574
  %v589 = vpack.c.b16 %v577, %v576
  %v590 = vpack.c.b16 %v579, %v578
  %v591 = vpack.c.b16 %v581, %v580
  %v592 = vpack.c.b16 %v583, %v582
  %v593 = vpack.c.b16 %v585, %v584
  %602 = vmatpush.bf16.msra.mxu0 %v593
  %603 = vmatpush.bf16.msra.mxu0 %v592
  %604 = vmatpush.bf16.msra.mxu0 %v591
  %605 = vmatpush.bf16.msra.mxu0 %v590
  %606 = vmatpush.bf16.msra.mxu0 %v589
  %607 = vmatpush.bf16.msra.mxu0 %v588
  %608 = vmatpush.bf16.msra.mxu0 %v587
  %609 = vmatpush.bf16.msra.mxu0 %v586
  %610 = vmatmul.bf16.gmra.mxu0 %v533
  %v611 = vpop.f32.mrf.mxu0
  %v612 = vadd.f32 %v552, %v611
  %v613 = vpop.f32.mrf.mxu0
  %614 = vdwg.mxu0
  %v615 = vmax.f32 %v612, 0.0
  %v616 = vpack.c.bf16 %v615, %v615
  %v617 = vld [vmem:[%s5] sm:$0xf]
  %v618 = vld [vmem:[%s5 + $0x4] sm:$0xf]
  %v619 = vld [vmem:[%s5 + $0x8] sm:$0xf]
  %v620 = vld [vmem:[%s5 + $0xc] sm:$0xf]
  %v621 = vld [vmem:[%s5 + $0x10] sm:$0xf]
  %v622 = vld [vmem:[%s5 + $0x14] sm:$0xf]
  %v623 = vld [vmem:[%s5 + $0x18] sm:$0xf]
  %v624 = vld [vmem:[%s5 + $0x1c] sm:$0xf]
  %v625 = vld [vmem:[%s5 + $0x20] sm:$0xf]
  %v626 = vld [vmem:[%s5 + $0x24] sm:$0xf]
  %v627 = vld [vmem:[%s5 + $0x28] sm:$0xf]
  %v628 = vld [vmem:[%s5 + $0x2c] sm:$0xf]
  %v629 = vld [vmem:[%s5 + $0x30] sm:$0xf]
  %v630 = vld [vmem:[%s5 + $0x34] sm:$0xf]
  %v631 = vld [vmem:[%s5 + $0x38] sm:$0xf]
  %v632 = vld [vmem:[%s5 + $0x3c] sm:$0xf]
  %v633 = vld [vmem:[%s6] sm:$0x1]
  %v635 = vperm.slane %v633, 0
  %v653 = vunpack.c.l.b16 %v617
  %v654 = vunpack.c.l.b16 %v618
  %v655 = vunpack.c.l.b16 %v619
  %v656 = vunpack.c.l.b16 %v620
  %v657 = vunpack.c.l.b16 %v621
  %v658 = vunpack.c.l.b16 %v622
  %v659 = vunpack.c.l.b16 %v623
  %v660 = vunpack.c.l.b16 %v624
  %v661 = vunpack.c.l.b16 %v625
  %v662 = vunpack.c.l.b16 %v626
  %v663 = vunpack.c.l.b16 %v627
  %v664 = vunpack.c.l.b16 %v628
  %v665 = vunpack.c.l.b16 %v629
  %v666 = vunpack.c.l.b16 %v630
  %v667 = vunpack.c.l.b16 %v631
  %v668 = vunpack.c.l.b16 %v632
  %v669 = vpack.c.b16 %v654, %v653
  %v670 = vpack.c.b16 %v656, %v655
  %v671 = vpack.c.b16 %v658, %v657
  %v672 = vpack.c.b16 %v660, %v659
  %v673 = vpack.c.b16 %v662, %v661
  %v674 = vpack.c.b16 %v664, %v663
  %v675 = vpack.c.b16 %v666, %v665
  %v676 = vpack.c.b16 %v668, %v667
  %685 = vmatpush.bf16.msra.mxu0 %v676
  %686 = vmatpush.bf16.msra.mxu0 %v675
  %687 = vmatpush.bf16.msra.mxu0 %v674
  %688 = vmatpush.bf16.msra.mxu0 %v673
  %689 = vmatpush.bf16.msra.mxu0 %v672
  %690 = vmatpush.bf16.msra.mxu0 %v671
  %691 = vmatpush.bf16.msra.mxu0 %v670
  %692 = vmatpush.bf16.msra.mxu0 %v669
  %693 = vmatmul.bf16.gmra.mxu0 %v616
  %v694 = vpop.f32.mrf.mxu0
  %v695 = vadd.f32 %v635, %v694
  %v696 = vpop.f32.mrf.mxu0
  %697 = vdwg.mxu0
  %v698 = vpack.c.bf16 %v695, %v695
  %699 = vst [vmem:[%s7] sm:$0xf] %v698
  // Predicated region
  $region30: #{neural_network_forward.1} parent=0 // pred_check
    _
  $region31: #{neural_network_forward.1} parent=0 // pred_check_branch
    %701 = sbr.rel (0) target = $region33
  $region32: #{neural_network_forward.1} parent=0 // pred_region
    _
  $region33: #{neural_network_forward.1} parent=0 // pred_fallthru
    _
  // Predicated region
  $region34: #{neural_network_forward.1} parent=0 // pred_check
    _
  $region35: #{neural_network_forward.1} parent=0 // pred_check_branch
    %703 = sbr.rel (0) target = $region37
  $region36: #{neural_network_forward.1} parent=0 // pred_region
    _
  $region37: #{neural_network_forward.1} parent=0 // pred_fallthru
    _

</llo_original>
